<compile_context>
chip_gen: v6e
topology: v6e:2x2x1
jax: 0.10.0
libtpu: 0.0.40
codegen_flags: <defaults>
</compile_context>

<pallas_src>
import jax
import jax.numpy as jnp
from jax.experimental import pallas as pl
from jax.experimental.pallas import tpu as pltpu

LANE = 128                 # vreg lane width
SUBLANE = 8                # f32 sublane count
TILE = LANE * SUBLANE      # 1024 elements = one (8, 128) f32 vreg tile


def linear_kernel(w_ref, b_ref, x_ref, o_ref):
    # w_ref / b_ref: (1,) scalars in SMEM; x_ref / o_ref: (block_rows, 128) in VMEM.
    w = w_ref[0]
    b = b_ref[0]
    o_ref[...] = x_ref[...] * w + b          # pure VPU: one vmul + one vadd per vreg


def _run_kernel(x2, w_s, b_s, max_block_rows):
    """x2: (rows, 128) f32 with rows a multiple of 8. Returns (rows, 128) f32."""
    rows = x2.shape[0]
    block_rows = min(max_block_rows, rows)   # both multiples of 8
    grid = (pl.cdiv(rows, block_rows),)      # Pallas masks a ragged last block

    return pl.pallas_call(
        linear_kernel,
        out_shape=jax.ShapeDtypeStruct((rows, LANE), x2.dtype),
        grid=grid,
        in_specs=[
            pl.BlockSpec(memory_space=pltpu.MemorySpace.SMEM),   # weight scalar
            pl.BlockSpec(memory_space=pltpu.MemorySpace.SMEM),   # bias scalar
            pl.BlockSpec((block_rows, LANE), lambda i: (i, 0)),  # lane-dense x tile
        ],
        out_specs=pl.BlockSpec((block_rows, LANE), lambda i: (i, 0)),
        # x2 is a wrapper-local temporary -> safe to write y in-place over it.
        input_output_aliases={2: 0},
        compiler_params=pltpu.CompilerParams(
            # Shard row-tiles across both TensorCores on v7x; no-op on v5e/v6e.
            dimension_semantics=("parallel",),
            # Default scoped VMEM is enough for 2 MiB blocks; bump
            # vmem_limit_bytes here if max_block_rows is raised to 8192 on v7x.
        ),
    )(w_s, b_s, x2)


def linear_forward(x, weight, bias, *, max_block_rows=4096):
    """x: (N, 1) f32, weight: (1, 1) f32, bias: (1,) f32 -> (N, 1) f32.

    Equivalent to PyTorch nn.Linear(1, 1): y = x @ weight.T + bias.
    """
    n, in_f = x.shape
    out_f = weight.shape[0]
    assert in_f == 1 and out_f == 1, "kernel specialised for nn.Linear(1, 1)"

    w_s = weight.reshape(1).astype(x.dtype)           # scalar weight -> SMEM
    b_s = bias.reshape(1).astype(x.dtype)             # scalar bias   -> SMEM

    flat = x.reshape(-1)
    n_aligned = (n // TILE) * TILE                    # largest multiple of 8*128

    y_parts = []
    if n_aligned > 0:
        # Aligned prefix: pure reshape (no pad copy), kernel does the work.
        x2 = flat[:n_aligned].reshape(n_aligned // LANE, LANE)
        y2 = _run_kernel(x2, w_s, b_s, max_block_rows)
        y_parts.append(y2.reshape(-1))

    rem = n - n_aligned
    if rem > 0:
        if n_aligned == 0:
            # Tiny batch (< 1024): pad a single (8,128) tile — negligible copy.
            xt = jnp.pad(flat, (0, TILE - n)).reshape(SUBLANE, LANE)
            yt = _run_kernel(xt, w_s, b_s, SUBLANE)
            y_parts.append(yt.reshape(-1)[:n])
        else:
            # Ragged tail in plain JAX, same f32 multiply-then-add order as the kernel.
            tail = flat[n_aligned:]
            y_parts.append(tail * w_s[0] + b_s[0])

    y = y_parts[0] if len(y_parts) == 1 else jnp.concatenate(y_parts)
    return y.reshape(n, out_f)


if __name__ == "__main__":
    key = jax.random.PRNGKey(0)
    kx, kw, kb = jax.random.split(key, 3)

    # Module: nn.Linear(1, 1) -> weight (1, 1), bias (1,)
    IN_F, OUT_F = 1, 1
    weight = jax.random.normal(kw, (OUT_F, IN_F), dtype=jnp.float32)
    bias = jax.random.normal(kb, (OUT_F,), dtype=jnp.float32)

    fwd = jax.jit(linear_forward)

    # Exercise all three wrapper paths:
    #   2048 -> aligned fast path (pure reshape, kernel over everything)
    #   1100 -> kernel on aligned 1024 prefix + plain-JAX ragged tail
    #      8 -> tiny batch, single padded (8,128) tile through the kernel
    for n in (2048, 1100, 8):
        x = jax.random.normal(jax.random.fold_in(kx, n), (n, IN_F), dtype=jnp.float32)
        y_ref = x @ weight.T + bias          # reference (plain JAX, same semantics)
        y = fwd(x, weight, bias)
        jax.block_until_ready(y)
        assert y.shape == (n, OUT_F)
        assert jnp.allclose(y, y_ref, atol=1e-5, rtol=1e-5)

    print("KERNEL_OK")
</pallas_src>

<mosaic_0001>
module attributes {stable_mosaic.version = 11 : i64} {
  func.func @linear_kernel(%arg0: i32, %arg1: memref<1xf32, #tpu.memory_space<smem>>, %arg2: memref<1xf32, #tpu.memory_space<smem>>, %arg3: memref<16x128xf32, #tpu.memory_space<vmem>>, %arg4: memref<16x128xf32, #tpu.memory_space<vmem>>) attributes {dimension_semantics = [#tpu.dimension_semantics<parallel>], iteration_bounds = array<i64: 1>, scalar_prefetch = 0 : i64, scratch_operands = 0 : i64, tpu.core_type = #tpu.core_type<tc>, window_params = [{transform_indices = @transform_0, window_bounds = array<i64: 1>}, {transform_indices = @transform_1, window_bounds = array<i64: 1>}, {transform_indices = @transform_2, window_bounds = array<i64: 16, 128>}, {transform_indices = @transform_3, window_bounds = array<i64: 16, 128>}]} {
    %c0 = arith.constant 0 : index
    %0 = memref.load %arg1[%c0] : memref<1xf32, #tpu.memory_space<smem>>
    %c0_0 = arith.constant 0 : index
    %1 = memref.load %arg2[%c0_0] : memref<1xf32, #tpu.memory_space<smem>>
    %c0_1 = arith.constant 0 : index
    %c0_2 = arith.constant 0 : index
    %2 = vector.load %arg3[%c0_1, %c0_2] : memref<16x128xf32, #tpu.memory_space<vmem>>, vector<16x128xf32>
    %3 = vector.broadcast %0 : f32 to vector<16x128xf32>
    %4 = arith.mulf %2, %3 : vector<16x128xf32>
    %5 = vector.broadcast %1 : f32 to vector<16x128xf32>
    %6 = arith.addf %4, %5 : vector<16x128xf32>
    %c0_3 = arith.constant 0 : index
    %c0_4 = arith.constant 0 : index
    %7 = vector.load %arg4[%c0_3, %c0_4] : memref<16x128xf32, #tpu.memory_space<vmem>>, vector<16x128xf32>
    tpu.vector_store %arg4[%c0_3, %c0_4], %6 {strides = array<i32>} : memref<16x128xf32, #tpu.memory_space<vmem>>, vector<16x128xf32>,
    return
  }
  func.func @transform_0(%arg0: i32) -> i32 {
    %c0_i32 = arith.constant 0 : i32
    %c0_i32_0 = arith.constant 0 : i32
    return %c0_i32 : i32
  }
  func.func @transform_1(%arg0: i32) -> i32 {
    %c0_i32 = arith.constant 0 : i32
    %c0_i32_0 = arith.constant 0 : i32
    return %c0_i32 : i32
  }
  func.func @transform_2(%arg0: i32) -> (i32, i32) {
    %c0_i32 = arith.constant 0 : i32
    %c0_i32_0 = arith.constant 0 : i32
    return %arg0, %c0_i32 : i32, i32
  }
  func.func @transform_3(%arg0: i32) -> (i32, i32) {
    %c0_i32 = arith.constant 0 : i32
    %c0_i32_0 = arith.constant 0 : i32
    return %arg0, %c0_i32 : i32, i32
  }
}

</mosaic_0001>

<llo_original>
// kernel: linear_forward.1
$region0: #{linear_forward.1}
  #allocation0 [shape = 'u32[]', space=smem, size = 0x4, offset = 0x4, fixed_abs, tag = 'smem constant byte address 0x4 - core index']
  #allocation1 [shape = 'u32[144,128]{1,0:T(1,128)}', space=vmem, size = 0x12000, scoped, tag = 'internal scratch']
  #allocation2 [shape = 'f32[1]{0:T(128)S(6)}', space=smem, size = 0x200, scoped, tag = 'scoped memory for linear_forward.1']
  #allocation3 [shape = 'f32[1]{0:T(128)S(6)}', space=smem, size = 0x200, scoped, tag = 'scoped memory for linear_forward.1']
  %s0 = inlined_call_operand.<no memory space> [shape: f32[1], index: 0, kind: input, shape index: {}]
  %s1 = inlined_call_operand.<no memory space> [shape: f32[1], index: 1, kind: input, shape index: {}]
  %s2 = inlined_call_operand.vmem [shape: f32[16,128], index: 2, kind: input, shape index: {}, may-alias: {2,3}]
  %s3 = inlined_call_operand.vmem [shape: f32[16,128], index: 3, kind: output, shape index: {}, may-alias: {2,3}]
  %s4 = sld [smem:[#allocation0]]
  $region22: #{linear_forward.1} parent=0
    _
  %s6 = ssub.s32 1, %s4
  %s7 = scalar_select 0, %s6, %s4
  %8 = sst [smem:[#allocation2]] %s0
  %9 = sst [smem:[#allocation3]] %s1
  // Predicated region
  $region2: #{linear_forward.1} parent=0 // pred_check
    _
  $region3: #{linear_forward.1} parent=0 // pred_check_branch
    %11 = sbr.rel (0) target = $region5
  $region4: #{linear_forward.1} parent=0 // pred_region
    _
  $region5: #{linear_forward.1} parent=0 // pred_fallthru
    _
  // Predicated region
  $region6: #{linear_forward.1} parent=0 // pred_check
    _
  $region7: #{linear_forward.1} parent=0 // pred_check_branch
    %13 = sbr.rel (0) target = $region9
  $region8: #{linear_forward.1} parent=0 // pred_region
    _
  $region9: #{linear_forward.1} parent=0 // pred_fallthru
    _
  // Predicated region
  $region10: #{linear_forward.1} parent=0 // pred_check
    _
  $region11: #{linear_forward.1} parent=0 // pred_check_branch
    %15 = sbr.rel (0) target = $region13
  $region12: #{linear_forward.1} parent=0 // pred_region
    _
  $region13: #{linear_forward.1} parent=0 // pred_fallthru
    _
  %s16 = sld [smem:[#allocation2]]
  %s17 = sld [smem:[#allocation3]]
  %v18 = vld [vmem:[%s2] sm:$0xff]
  %v19 = vld [vmem:[%s2 + $0x8] sm:$0xff]
  %v20 = vstv %s16
  %v21 = vmul.f32 %v18, %v20
  %v22 = vmul.f32 %v19, %v20
  %v23 = vstv %s17
  %v24 = vadd.f32 %v21, %v23
  %v25 = vadd.f32 %v22, %v23
  %26 = vst [vmem:[%s3] sm:$0xff] %v24
  %27 = vst [vmem:[%s3 + $0x8] sm:$0xff] %v25
  // Predicated region
  $region14: #{linear_forward.1} parent=0 // pred_check
    _
  $region15: #{linear_forward.1} parent=0 // pred_check_branch
    %29 = sbr.rel (0) target = $region17
  $region16: #{linear_forward.1} parent=0 // pred_region
    _
  $region17: #{linear_forward.1} parent=0 // pred_fallthru
    _
  // Predicated region
  $region18: #{linear_forward.1} parent=0 // pred_check
    _
  $region19: #{linear_forward.1} parent=0 // pred_check_branch
    %31 = sbr.rel (0) target = $region21
  $region20: #{linear_forward.1} parent=0 // pred_region
    _
  $region21: #{linear_forward.1} parent=0 // pred_fallthru
    _

</llo_original>
